<compile_context>
chip_gen: v5e
topology: v5e:2x2
jax: 0.10.0
libtpu: 0.0.40
codegen_flags: <defaults>
</compile_context>

<pallas_src>
import math
from functools import partial

import jax
import jax.numpy as jnp
from jax.experimental import pallas as pl
from jax.experimental.pallas import tpu as pltpu

EPS = 1e-5  # torch nn.LayerNorm default eps
NEG_BIG = -1e30  # key-mask value for padded tokens (finite -> no inf-inf NaN)


def _layer_norm(x, g, b):
    mu = jnp.mean(x, axis=-1, keepdims=True)
    var = jnp.mean((x - mu) ** 2, axis=-1, keepdims=True)
    return (x - mu) * jax.lax.rsqrt(var + EPS) * g + b


# --------------------------- prologue kernel -------------------------------
# patch-embed (conv1 as matmul) + class/pos embedding + ln_pre

def _embed_kernel(p_ref, w_ref, bias_ref, g_ref, b_ref, tok_ref):
    TB, S, K = p_ref.shape
    D = w_ref.shape[1]
    emb = jnp.dot(p_ref[...].reshape(TB * S, K), w_ref[...],
                  preferred_element_type=jnp.float32)          # (TB*S, D) f32
    tok = emb.reshape(TB, S, D) + bias_ref[...]                 # +pos (+cls row0)
    tok_ref[...] = _layer_norm(tok, g_ref[...], b_ref[...])


# --------------------------- transformer kernel ----------------------------

def _vit_layers_kernel(n_head, s_real,
                       tok_ref,
                       wq_ref, wk_ref, wv_ref, wo_ref,
                       wfc_ref, wpr_ref, pk_ref,
                       lnpost_g, lnpost_b, proj_ref,
                       out_ref, xs):
    l = pl.program_id(1)
    n_layers = pl.num_programs(1)

    TB, S, D = tok_ref.shape
    M = TB * S
    H = n_head
    hd = D // H
    scale = 1.0 / math.sqrt(hd)
    Dout = proj_ref.shape[-1]

    # Residual stream for this batch tile is (re)loaded at layer 0.
    # NOTE: correctness relies on the layer axis being the innermost
    # ("arbitrary") grid axis -- do not reorder the grid or mark it parallel.
    @pl.when(l == 0)
    def _():
        xs[...] = tok_ref[...]

    # Packed per-layer scalars:
    #   [ln1_g | ln1_b | ln2_g | ln2_b | b_out | b_pr | b_in(3D) | b_fc(4D)]
    pp = pk_ref[0]                              # (1, 13*D) f32
    ln1_g = pp[:, 0:D]
    ln1_b = pp[:, D:2 * D]
    ln2_g = pp[:, 2 * D:3 * D]
    ln2_b = pp[:, 3 * D:4 * D]
    b_out = pp[:, 4 * D:5 * D]
    b_pr = pp[:, 5 * D:6 * D]
    off_bin = 6 * D
    off_bfc = 9 * D
    b_fc = pp[:, off_bfc:off_bfc + 4 * D]

    x = xs[...].reshape(M, D)                   # (M, D) f32, M = TB*S

    # ---------------- attention branch: x + out_proj(MHA(ln_1(x))) ---------
    h = _layer_norm(x, ln1_g, ln1_b).astype(jnp.bfloat16)       # (M, D) bf16

    # additive mask: 0 on real keys, NEG_BIG on padded keys
    key_bias = jnp.where(
        jax.lax.broadcasted_iota(jnp.int32, (1, S), 1) < s_real,
        0.0, NEG_BIG).astype(jnp.float32)                       # (1, S)

    attn = jnp.zeros((M, D), jnp.float32)
    # TODO(synk): for very long sequences switch this static head loop to a
    #             lax.fori_loop over head groups / flash-style key tiling.
    for hh in range(H):
        bq = pp[:, off_bin + hh * hd: off_bin + (hh + 1) * hd]
        bk = pp[:, off_bin + D + hh * hd: off_bin + D + (hh + 1) * hd]
        bv = pp[:, off_bin + 2 * D + hh * hd: off_bin + 2 * D + (hh + 1) * hd]

        q = (jnp.dot(h, wq_ref[0, hh], preferred_element_type=jnp.float32)
             + bq).astype(jnp.bfloat16).reshape(TB, S, hd)
        k = (jnp.dot(h, wk_ref[0, hh], preferred_element_type=jnp.float32)
             + bk).astype(jnp.bfloat16).reshape(TB, S, hd)
        v = (jnp.dot(h, wv_ref[0, hh], preferred_element_type=jnp.float32)
             + bv).astype(jnp.bfloat16).reshape(TB, S, hd)

        s = jnp.einsum('tqe,tke->tqk', q, k,
                       preferred_element_type=jnp.float32) * scale + key_bias
        m = jnp.max(s, axis=-1, keepdims=True)
        e = jnp.exp(s - m)
        denom = jnp.sum(e, axis=-1, keepdims=True)
        # approx reciprocal runs on the EUP; ~2^-12 relative error in the
        # softmax normalisation (documented tolerance vs the torch reference).
        p = (e * pl.reciprocal(denom, approx=True)).astype(jnp.bfloat16)

        ctx = jnp.einsum('tqk,tke->tqe', p, v,
                         preferred_element_type=jnp.float32)    # (TB, S, hd)
        attn = attn + jnp.dot(ctx.astype(jnp.bfloat16).reshape(M, hd),
                              wo_ref[0, hh],
                              preferred_element_type=jnp.float32)

    x = x + attn + b_out

    # ---------------- MLP branch: x + c_proj(QuickGELU(c_fc(ln_2(x)))) -----
    h2 = _layer_norm(x, ln2_g, ln2_b).astype(jnp.bfloat16)
    fc = jnp.dot(h2, wfc_ref[0], preferred_element_type=jnp.float32) + b_fc
    fc = fc * jax.nn.sigmoid(1.702 * fc)                        # QuickGELU f32
    mlp = jnp.dot(fc.astype(jnp.bfloat16), wpr_ref[0],
                  preferred_element_type=jnp.float32) + b_pr
    x = x + mlp

    xs[...] = x.reshape(TB, S, D)   # residual stream stays resident in VMEM

    # ---------------- last-layer epilogue: ln_post(CLS) @ proj -------------
    @pl.when(l == n_layers - 1)
    def _():
        cls = x.reshape(TB, S, D)[:, 0:1, :].reshape(TB, D)
        cls = _layer_norm(cls, lnpost_g[...], lnpost_b[...])
        out_ref[...] = jnp.dot(cls.astype(jnp.bfloat16), proj_ref[...],
                               preferred_element_type=jnp.float32
                               ).reshape(TB, 1, Dout)


# ----------------------------- parameter init ------------------------------

def init_params(key, *, input_resolution, patch_size, width, layers, heads,
                output_dim):
    n_patches = (input_resolution // patch_size) ** 2
    seq = n_patches + 1
    scale = width ** (-0.5)
    D, L, d4 = width, layers, width * 4

    ks = iter(jax.random.split(key, 12))

    def nrm(shape, s=0.02):
        return (s * jax.random.normal(next(ks), shape)).astype(jnp.float32)

    return {
        "conv_w": nrm((D, 3, patch_size, patch_size)),
        "class_embedding": (scale * jax.random.normal(next(ks), (D,))
                            ).astype(jnp.float32),
        "positional_embedding": (scale * jax.random.normal(next(ks), (seq, D))
                                 ).astype(jnp.float32),
        "ln_pre_g": jnp.ones((1, D), jnp.float32),
        "ln_pre_b": jnp.zeros((1, D), jnp.float32),
        "ln_post_g": jnp.ones((1, D), jnp.float32),
        "ln_post_b": jnp.zeros((1, D), jnp.float32),
        "proj": (scale * jax.random.normal(next(ks), (D, output_dim))
                 ).astype(jnp.float32),
        # per-layer params stacked on a leading layer axis (pipelined weights)
        "ln1_g": jnp.ones((L, 1, D), jnp.float32),
        "ln1_b": jnp.zeros((L, 1, D), jnp.float32),
        "w_in": nrm((L, D, 3 * D)),
        "b_in": nrm((L, 1, 3 * D)),
        "w_out": nrm((L, D, D)),
        "b_out": nrm((L, 1, D)),
        "ln2_g": jnp.ones((L, 1, D), jnp.float32),
        "ln2_b": jnp.zeros((L, 1, D), jnp.float32),
        "w_fc": nrm((L, D, d4)),
        "b_fc": nrm((L, 1, d4)),
        "w_pr": nrm((L, d4, D)),
        "b_pr": nrm((L, 1, D)),
    }


# ----------------------------- wrapper helpers ------------------------------

def _vmem_limit_bytes():
    # ~110 MiB on v5e/v6e (128 MiB physical), ~85% of 64 MiB on v7x.
    try:
        cap = getattr(pltpu.get_tpu_info(), "vmem_capacity_bytes", None)
        if cap:
            return int(min(cap * 0.85, 110 * 1024 * 1024))
    except Exception:
        pass
    return 56 * 1024 * 1024


def _pick_batch_tile(B, tb_max=8):
    # Largest tile that divides B while keeping >= 2 batch tiles on the
    # "parallel" axis (so both v7x TensorCores get work).
    for tb in range(min(tb_max, B), 0, -1):
        if B % tb == 0 and (B // tb >= 2 or B == 1):
            return tb
    return 1


# ----------------------------- forward wrapper ------------------------------

def vision_transformer_forward(params, x, *, patch_size, heads):
    B, C, Him, Wim = x.shape
    p = patch_size
    gh, gw = Him // p, Wim // p
    n = gh * gw
    S_real = n + 1
    S = ((S_real + 7) // 8) * 8                 # pad seq to a sublane multiple
    D = params["conv_w"].shape[0]
    D4 = params["w_fc"].shape[-1]
    L = params["w_in"].shape[0]
    H = heads
    hd = D // H
    Dout = params["proj"].shape[1]
    assert D % H == 0

    Cpp = C * p * p
    Kpad = ((Cpp + 127) // 128) * 128           # lane-dense contraction dim

    TB = _pick_batch_tile(B)
    vmem_limit = _vmem_limit_bytes()
    bf = lambda a: a.astype(jnp.bfloat16)

    # ---- conv1 (stride=kernel=patch, no bias) == patch extraction + matmul.
    patches = (x.reshape(B, C, gh, p, gw, p)
                 .transpose(0, 2, 4, 1, 3, 5)
                 .reshape(B, n, Cpp))
    patches_ext = jnp.zeros((B, S, Kpad), jnp.float32)
    patches_ext = bf(patches_ext.at[:, 1:S_real, :Cpp].set(patches))

    w_embed = params["conv_w"].reshape(D, Cpp).T                 # (Cpp, D)
    w_embed = bf(jnp.pad(w_embed, ((0, Kpad - Cpp), (0, 0))))    # (Kpad, D)

    # class embedding folded into row 0 of the positional bias; padded rows 0.
    tok_bias = jnp.zeros((S, D), jnp.float32)
    tok_bias = tok_bias.at[:S_real].set(params["positional_embedding"])
    tok_bias = tok_bias.at[0].add(params["class_embedding"])

    # ---- prologue pallas_call: tokens = ln_pre(patch_embed + cls/pos) -----
    tokens = pl.pallas_call(
        _embed_kernel,
        out_shape=jax.ShapeDtypeStruct((B, S, D), jnp.float32),
        grid_spec=pltpu.PrefetchScalarGridSpec(
            num_scalar_prefetch=0,
            grid=(B // TB,),
            in_specs=[
                pl.BlockSpec((TB, S, Kpad), lambda b: (b, 0, 0)),
                pl.BlockSpec((Kpad, D), lambda b: (0, 0)),
                pl.BlockSpec((S, D), lambda b: (0, 0)),
                pl.BlockSpec((1, D), lambda b: (0, 0)),
                pl.BlockSpec((1, D), lambda b: (0, 0)),
            ],
            out_specs=pl.BlockSpec((TB, S, D), lambda b: (b, 0, 0)),
        ),
        compiler_params=pltpu.CompilerParams(
            dimension_semantics=("parallel",),
            vmem_limit_bytes=vmem_limit,
        ),
    )(patches_ext, w_embed, tok_bias, params["ln_pre_g"], params["ln_pre_b"])

    # ---- pre-split attention weights into per-head layouts (no in-kernel
    #      head relayouts): W_q/k/v -> (L, H, D, hd), W_out -> (L, H, hd, D).
    w_in = params["w_in"]                                        # (L, D, 3D)
    w_q = bf(w_in[:, :, :D].reshape(L, D, H, hd).transpose(0, 2, 1, 3))
    w_k = bf(w_in[:, :, D:2 * D].reshape(L, D, H, hd).transpose(0, 2, 1, 3))
    w_v = bf(w_in[:, :, 2 * D:].reshape(L, D, H, hd).transpose(0, 2, 1, 3))
    w_o = bf(params["w_out"].reshape(L, H, hd, D))
    w_fc = bf(params["w_fc"])
    w_pr = bf(params["w_pr"])

    # ---- pack the 8 tiny per-layer params into one (L, 1, 13*D) stream ----
    packed = jnp.concatenate(
        [params["ln1_g"], params["ln1_b"],
         params["ln2_g"], params["ln2_b"],
         params["b_out"], params["b_pr"],
         params["b_in"], params["b_fc"]],
        axis=-1).astype(jnp.float32)                             # (L, 1, 13D)

    # ---- advisory cost estimate so XLA schedules around the long call -----
    flops = 2 * B * L * S * D * (12 * D + 2 * S)
    transcendentals = B * L * S * (4 * D + H * S)
    weight_bytes = L * (12 * D * D * 2 + 13 * D * 4)
    bytes_accessed = weight_bytes * (B // TB) + B * S * D * 4 + B * Dout * 4
    ce = pl.CostEstimate(flops=int(flops),
                         transcendentals=int(transcendentals),
                         bytes_accessed=int(bytes_accessed))

    per_layer4 = lambda b, l: (l, 0, 0, 0)
    per_layer3 = lambda b, l: (l, 0, 0)
    const2 = lambda b, l: (0, 0)

    out = pl.pallas_call(
        partial(_vit_layers_kernel, H, S_real),
        out_shape=jax.ShapeDtypeStruct((B, 1, Dout), jnp.float32),
        grid_spec=pltpu.PrefetchScalarGridSpec(
            num_scalar_prefetch=0,
            grid=(B // TB, L),
            in_specs=[
                pl.BlockSpec((TB, S, D), lambda b, l: (b, 0, 0)),   # tokens
                pl.BlockSpec((1, H, D, hd), per_layer4),            # W_q
                pl.BlockSpec((1, H, D, hd), per_layer4),            # W_k
                pl.BlockSpec((1, H, D, hd), per_layer4),            # W_v
                pl.BlockSpec((1, H, hd, D), per_layer4),            # W_out
                pl.BlockSpec((1, D, D4), per_layer3),               # c_fc W
                pl.BlockSpec((1, D4, D), per_layer3),               # c_proj W
                pl.BlockSpec((1, 1, 13 * D), per_layer3),           # packed small params
                pl.BlockSpec((1, D), const2),                       # ln_post gamma
                pl.BlockSpec((1, D), const2),                       # ln_post beta
                pl.BlockSpec((D, Dout), const2),                    # final projection
            ],
            out_specs=pl.BlockSpec((TB, 1, Dout), lambda b, l: (b, 0, 0)),
            scratch_shapes=[pltpu.VMEM((TB, S, D), jnp.float32)],   # resident residual
        ),
        compiler_params=pltpu.CompilerParams(
            dimension_semantics=("parallel", "arbitrary"),
            vmem_limit_bytes=vmem_limit,
        ),
        cost_estimate=ce,
    )(tokens, w_q, w_k, w_v, w_o, w_fc, w_pr, packed,
      params["ln_post_g"], params["ln_post_b"], bf(params["proj"]))

    return out[:, 0, :]                                          # (B, output_dim)


if __name__ == "__main__":
    # small but layout-realistic config: 16x16 images, patch 4 -> 16 patches
    # (+CLS = 17, padded to 24), width 128 (lane-dense), 4 heads, 2 layers.
    B = 2
    INPUT_RES = 16
    PATCH = 4
    WIDTH = 128
    LAYERS = 2
    HEADS = 4
    OUTPUT_DIM = 64

    key = jax.random.PRNGKey(0)
    pkey, xkey = jax.random.split(key)
    params = init_params(pkey, input_resolution=INPUT_RES, patch_size=PATCH,
                         width=WIDTH, layers=LAYERS, heads=HEADS,
                         output_dim=OUTPUT_DIM)
    x = jax.random.normal(xkey, (B, 3, INPUT_RES, INPUT_RES), dtype=jnp.float32)

    out = vision_transformer_forward(params, x, patch_size=PATCH, heads=HEADS)
    out = jax.block_until_ready(out)

    assert out.shape == (B, OUTPUT_DIM), out.shape
    assert bool(jnp.all(jnp.isfinite(out)))
    print("KERNEL_OK")
</pallas_src>

<mosaic_0001>
module attributes {stable_mosaic.version = 11 : i64} {
  func.func @_embed_kernel(%arg0: i32, %arg1: memref<1x24x128xbf16, #tpu.memory_space<vmem>>, %arg2: memref<128x128xbf16, #tpu.memory_space<vmem>>, %arg3: memref<24x128xf32, #tpu.memory_space<vmem>>, %arg4: memref<1x128xf32, #tpu.memory_space<vmem>>, %arg5: memref<1x128xf32, #tpu.memory_space<vmem>>, %arg6: memref<1x24x128xf32, #tpu.memory_space<vmem>>) attributes {dimension_semantics = [#tpu.dimension_semantics<parallel>], iteration_bounds = array<i64: 2>, scalar_prefetch = 0 : i64, scratch_operands = 0 : i64, tpu.core_type = #tpu.core_type<tc>, window_params = [{transform_indices = @transform_0, window_bounds = array<i64: 1, 24, 128>}, {pipeline_mode = #tpu.pipeline_mode<synchronous>, transform_indices = @transform_1, window_bounds = array<i64: 128, 128>}, {pipeline_mode = #tpu.pipeline_mode<synchronous>, transform_indices = @transform_2, window_bounds = array<i64: 24, 128>}, {pipeline_mode = #tpu.pipeline_mode<synchronous>, transform_indices = @transform_3, window_bounds = array<i64: 1, 128>}, {pipeline_mode = #tpu.pipeline_mode<synchronous>, transform_indices = @transform_4, window_bounds = array<i64: 1, 128>}, {transform_indices = @transform_5, window_bounds = array<i64: 1, 24, 128>}]} {
    %c0 = arith.constant 0 : index
    %c0_0 = arith.constant 0 : index
    %c0_1 = arith.constant 0 : index
    %0 = vector.load %arg1[%c0, %c0_0, %c0_1] : memref<1x24x128xbf16, #tpu.memory_space<vmem>>, vector<1x24x128xbf16>
    %1 = vector.shape_cast %0 : vector<1x24x128xbf16> to vector<24x128xbf16>
    %c0_2 = arith.constant 0 : index
    %c0_3 = arith.constant 0 : index
    %2 = vector.load %arg2[%c0_2, %c0_3] : memref<128x128xbf16, #tpu.memory_space<vmem>>, vector<128x128xbf16>
    %cst = arith.constant dense<0.000000e+00> : vector<24x128xf32>
    %3 = tpu.matmul %1, %2, %cst {dimension_numbers = #tpu.dot_dimension_numbers<[1], [0], [0], [1], [0, 0, 1, 1], [], []>} : vector<24x128xbf16>, vector<128x128xbf16>, vector<24x128xf32> -> vector<24x128xf32>
    %4 = vector.shape_cast %3 : vector<24x128xf32> to vector<1x24x128xf32>
    %c0_4 = arith.constant 0 : index
    %c0_5 = arith.constant 0 : index
    %5 = vector.load %arg3[%c0_4, %c0_5] : memref<24x128xf32, #tpu.memory_space<vmem>>, vector<24x128xf32>
    %6 = vector.shape_cast %5 : vector<24x128xf32> to vector<1x24x128xf32>
    %7 = arith.addf %4, %6 : vector<1x24x128xf32>
    %c0_6 = arith.constant 0 : index
    %c0_7 = arith.constant 0 : index
    %8 = vector.load %arg4[%c0_6, %c0_7] : memref<1x128xf32, #tpu.memory_space<vmem>>, vector<1x128xf32>
    %c0_8 = arith.constant 0 : index
    %c0_9 = arith.constant 0 : index
    %9 = vector.load %arg5[%c0_8, %c0_9] : memref<1x128xf32, #tpu.memory_space<vmem>>, vector<1x128xf32>
    %cst_10 = arith.constant dense<0.000000e+00> : vector<1x24xf32>
    %10 = vector.multi_reduction <add>, %7, %cst_10 [2] : vector<1x24x128xf32> to vector<1x24xf32>
    %11 = vector.shape_cast %10 : vector<1x24xf32> to vector<1x24x1xf32>
    %cst_11 = arith.constant 1.280000e+02 : f32
    %12 = vector.broadcast %cst_11 : f32 to vector<1x24x1xf32>
    %13 = arith.divf %11, %12 : vector<1x24x1xf32>
    %14 = vector.broadcast %13 : vector<1x24x1xf32> to vector<1x24x128xf32>
    %15 = arith.subf %7, %14 : vector<1x24x128xf32>
    %16 = arith.mulf %15, %15 : vector<1x24x128xf32>
    %cst_12 = arith.constant dense<0.000000e+00> : vector<1x24xf32>
    %17 = vector.multi_reduction <add>, %16, %cst_12 [2] : vector<1x24x128xf32> to vector<1x24xf32>
    %18 = vector.shape_cast %17 : vector<1x24xf32> to vector<1x24x1xf32>
    %cst_13 = arith.constant 1.280000e+02 : f32
    %19 = vector.broadcast %cst_13 : f32 to vector<1x24x1xf32>
    %20 = arith.divf %18, %19 : vector<1x24x1xf32>
    %21 = vector.broadcast %13 : vector<1x24x1xf32> to vector<1x24x128xf32>
    %22 = arith.subf %7, %21 : vector<1x24x128xf32>
    %cst_14 = arith.constant 9.99999974E-6 : f32
    %23 = vector.broadcast %cst_14 : f32 to vector<1x24x1xf32>
    %24 = arith.addf %20, %23 : vector<1x24x1xf32>
    %25 = math.rsqrt %24 : vector<1x24x1xf32>
    %26 = vector.broadcast %25 : vector<1x24x1xf32> to vector<1x24x128xf32>
    %27 = arith.mulf %22, %26 : vector<1x24x128xf32>
    %28 = vector.shape_cast %8 : vector<1x128xf32> to vector<1x1x128xf32>
    %29 = vector.broadcast %28 : vector<1x1x128xf32> to vector<1x24x128xf32>
    %30 = arith.mulf %27, %29 : vector<1x24x128xf32>
    %31 = vector.shape_cast %9 : vector<1x128xf32> to vector<1x1x128xf32>
    %32 = vector.broadcast %31 : vector<1x1x128xf32> to vector<1x24x128xf32>
    %33 = arith.addf %30, %32 : vector<1x24x128xf32>
    %c0_15 = arith.constant 0 : index
    %c0_16 = arith.constant 0 : index
    %c0_17 = arith.constant 0 : index
    %34 = vector.load %arg6[%c0_15, %c0_16, %c0_17] : memref<1x24x128xf32, #tpu.memory_space<vmem>>, vector<1x24x128xf32>
    tpu.vector_store %arg6[%c0_15, %c0_16, %c0_17], %33 {strides = array<i32>} : memref<1x24x128xf32, #tpu.memory_space<vmem>>, vector<1x24x128xf32>,
    return
  }
  func.func @transform_0(%arg0: i32) -> (i32, i32, i32) {
    %c0_i32 = arith.constant 0 : i32
    %c0_i32_0 = arith.constant 0 : i32
    %c0_i32_1 = arith.constant 0 : i32
    return %arg0, %c0_i32, %c0_i32_0 : i32, i32, i32
  }
  func.func @transform_1(%arg0: i32) -> (i32, i32) {
    %c0_i32 = arith.constant 0 : i32
    %c0_i32_0 = arith.constant 0 : i32
    %c0_i32_1 = arith.constant 0 : i32
    return %c0_i32, %c0_i32_0 : i32, i32
  }
  func.func @transform_2(%arg0: i32) -> (i32, i32) {
    %c0_i32 = arith.constant 0 : i32
    %c0_i32_0 = arith.constant 0 : i32
    %c0_i32_1 = arith.constant 0 : i32
    return %c0_i32, %c0_i32_0 : i32, i32
  }
  func.func @transform_3(%arg0: i32) -> (i32, i32) {
    %c0_i32 = arith.constant 0 : i32
    %c0_i32_0 = arith.constant 0 : i32
    %c0_i32_1 = arith.constant 0 : i32
    return %c0_i32, %c0_i32_0 : i32, i32
  }
  func.func @transform_4(%arg0: i32) -> (i32, i32) {
    %c0_i32 = arith.constant 0 : i32
    %c0_i32_0 = arith.constant 0 : i32
    %c0_i32_1 = arith.constant 0 : i32
    return %c0_i32, %c0_i32_0 : i32, i32
  }
  func.func @transform_5(%arg0: i32) -> (i32, i32, i32) {
    %c0_i32 = arith.constant 0 : i32
    %c0_i32_0 = arith.constant 0 : i32
    %c0_i32_1 = arith.constant 0 : i32
    return %arg0, %c0_i32, %c0_i32_0 : i32, i32, i32
  }
}

</mosaic_0001>

<llo_original>
// kernel: tpu_custom_call.1
$region0: #{tpu_custom_call.1}
  #allocation0 [shape = 'u32[]', space=smem, size = 0x4, offset = 0x4, fixed_abs, tag = 'smem constant byte address 0x4 - core index']
  #allocation1 [shape = 'u32[72,128]{1,0:T(1,128)}', space=vmem, size = 0x9000, scoped, tag = 'internal scratch']
  %s0 = inlined_call_operand.hbm [shape: bf16[2,24,128], index: 0, kind: input, shape index: {}]
  %s1 = inlined_call_operand.hbm [shape: bf16[128,128], index: 1, kind: input, shape index: {}]
  %s2 = inlined_call_operand.hbm [shape: f32[24,128], index: 2, kind: input, shape index: {}]
  %s3 = inlined_call_operand.vmem [shape: f32[1,128], index: 3, kind: input, shape index: {}]
  %s4 = inlined_call_operand.vmem [shape: f32[1,128], index: 4, kind: input, shape index: {}]
  %s5 = inlined_call_operand.hbm [shape: f32[2,24,128], index: 5, kind: output, shape index: {}]
  %s6 = sld [smem:[#allocation0]]
  $region65: #{tpu_custom_call.1} parent=0
    _
  %s8 = ssub.s32 1, %s6
  %s9 = scalar_select 0, %s8, %s6
  $region1: #{tpu_custom_call.1} parent=0
    #allocation2 [shape = 'u8[12288]{0}', space=vmem, size = 0x3000, scoped, tag = 'input window, operand 0']
    #allocation3 [shape = 's32[2]{0}', space=sflag, size = 0x8, scoped, tag = 'scoped memory for tpu_custom_call.1']
    #allocation4 [shape = 's32[2]{0}', space=sflag, size = 0x8, scoped, tag = 'scoped memory for tpu_custom_call.1']
    #allocation5 [shape = 'u8[32768]{0}', space=vmem, size = 0x8000, scoped, tag = 'input window, operand 1, single buffered']
    #allocation6 [shape = 's32[1]{0}', space=sflag, size = 0x4, scoped, tag = 'scoped memory for tpu_custom_call.1']
    #allocation7 [shape = 'u8[12288]{0}', space=vmem, size = 0x3000, scoped, tag = 'input window, operand 2, single buffered']
    #allocation8 [shape = 'u8[24576]{0}', space=vmem, size = 0x6000, scoped, tag = 'output window, operand 0']
    %10 = vsyncpa [#allocation3], 0
    %s11 = scalar_lea.sflag [#allocation3], 1
    %12 = vsyncpa %s11, 0
    %13 = vsyncpa [#allocation6], 0
    %14 = vsyncpa [#allocation4], 0
    %s15 = scalar_lea.sflag [#allocation4], 1
    %16 = vsyncpa %s15, 0
    loop: start=0, step=1, limit=4
    $region2: #{tpu_custom_call.1} parent=1 // loop_pre_header
      _
    $region3: #{tpu_custom_call.1} parent=1 // loop_header
      %s18 = sphi 0, %s22
      %p19 = scmp.ge.s32.totalorder %s18, 4
      %s28 = sphi 0, %s30
      %s31 = sphi 0, %s28
      %s32 = sphi 0, %s31
      %s48 = sphi 0, %s32
      %s52 = sphi 0, %s52
      %s54 = sphi 0, %s52
      %s55 = sphi 0, %s54
      %s69 = sphi 0, %s55
      %s73 = sphi 0, %s73
      %s75 = sphi 0, %s73
      %s76 = sphi 0, %s75
      %s90 = sphi 0, %s76
      %s94 = sphi 0, %s94
      %s96 = sphi 0, %s94
      %s97 = sphi 0, %s96
      %s111 = sphi 0, %s97
      %s115 = sphi 0, %s115
      %s117 = sphi 0, %s115
      %s118 = sphi 0, %s117
      %s132 = sphi 0, %s118
      %s138 = sphi 0, %s140
      %s141 = sphi 0, %s138
      %s142 = sphi 0, %s141
      %s158 = sphi 0, %s142
    $region4: #{tpu_custom_call.1} parent=1 // loop_header_branch
      %21 = sbr.rel (%p19) target = $region8
    $region5: #{tpu_custom_call.1} parent=1 // loop_body
      %s23 = ssub.s32 %s18, 1
      %s24 = ssub.s32 %s18, 2
      %s25 = sadd.s32 %s18, 1
      %s26 = ssub.s32 %s18, %s25
      %p27 = scmp.eq.s32.totalorder %s26, 0
      %s29 = sadd.s32 %s28, 1
      %s30 = scalar_select %p27, %s28, %s29
      %p33 = pneg %p27
      %p34 = scmp.eq.s32.totalorder %s18, 1
      %p35 = por %p33, %p34
      %p36 = scmp.ne.s32.totalorder %s28, %s31
      %p37 = scmp.eq.s32.totalorder %s18, 0
      %p38 = por %p36, %p37
      %p39 = scmp.ne.s32.totalorder %s28, %s31
      %p40 = scmp.eq.s32.totalorder %s23, 1
      %p41 = por %p39, %p40
      %p42 = scmp.ne.s32.totalorder %s31, %s32
      %p43 = scmp.eq.s32.totalorder %s23, 0
      %p44 = por %p42, %p43
      %p45 = scmp.ne.s32.totalorder %s31, %s32
      %p46 = scmp.eq.s32.totalorder %s24, 1
      %p47 = por %p45, %p46
      %p49 = scmp.ne.s32.totalorder %s32, %s48
      %p50 = scmp.eq.s32.totalorder %s24, 0
      %p51 = por %p49, %p50
      %s53 = sadd.s32 %s52, 1
      %p56 = scmp.eq.s32.totalorder %s18, 1
      %p57 = scmp.ne.s32.totalorder %s52, %s54
      %p58 = scmp.eq.s32.totalorder %s18, 0
      %p59 = por %p57, %p58
      %p60 = scmp.ne.s32.totalorder %s52, %s54
      %p61 = scmp.eq.s32.totalorder %s23, 1
      %p62 = por %p60, %p61
      %p63 = scmp.ne.s32.totalorder %s54, %s55
      %p64 = scmp.eq.s32.totalorder %s23, 0
      %p65 = por %p63, %p64
      %p66 = scmp.ne.s32.totalorder %s54, %s55
      %p67 = scmp.eq.s32.totalorder %s24, 1
      %p68 = por %p66, %p67
      %p70 = scmp.ne.s32.totalorder %s55, %s69
      %p71 = scmp.eq.s32.totalorder %s24, 0
      %p72 = por %p70, %p71
      %s74 = sadd.s32 %s73, 1
      %p77 = scmp.eq.s32.totalorder %s18, 1
      %p78 = scmp.ne.s32.totalorder %s73, %s75
      %p79 = scmp.eq.s32.totalorder %s18, 0
      %p80 = por %p78, %p79
      %p81 = scmp.ne.s32.totalorder %s73, %s75
      %p82 = scmp.eq.s32.totalorder %s23, 1
      %p83 = por %p81, %p82
      %p84 = scmp.ne.s32.totalorder %s75, %s76
      %p85 = scmp.eq.s32.totalorder %s23, 0
      %p86 = por %p84, %p85
      %p87 = scmp.ne.s32.totalorder %s75, %s76
      %p88 = scmp.eq.s32.totalorder %s24, 1
      %p89 = por %p87, %p88
      %p91 = scmp.ne.s32.totalorder %s76, %s90
      %p92 = scmp.eq.s32.totalorder %s24, 0
      %p93 = por %p91, %p92
      %s95 = sadd.s32 %s94, 1
      %p98 = scmp.eq.s32.totalorder %s18, 1
      %p99 = scmp.ne.s32.totalorder %s94, %s96
      %p100 = scmp.eq.s32.totalorder %s18, 0
      %p101 = por %p99, %p100
      %p102 = scmp.ne.s32.totalorder %s94, %s96
      %p103 = scmp.eq.s32.totalorder %s23, 1
      %p104 = por %p102, %p103
      %p105 = scmp.ne.s32.totalorder %s96, %s97
      %p106 = scmp.eq.s32.totalorder %s23, 0
      %p107 = por %p105, %p106
      %p108 = scmp.ne.s32.totalorder %s96, %s97
      %p109 = scmp.eq.s32.totalorder %s24, 1
      %p110 = por %p108, %p109
      %p112 = scmp.ne.s32.totalorder %s97, %s111
      %p113 = scmp.eq.s32.totalorder %s24, 0
      %p114 = por %p112, %p113
      %s116 = sadd.s32 %s115, 1
      %p119 = scmp.eq.s32.totalorder %s18, 1
      %p120 = scmp.ne.s32.totalorder %s115, %s117
      %p121 = scmp.eq.s32.totalorder %s18, 0
      %p122 = por %p120, %p121
      %p123 = scmp.ne.s32.totalorder %s115, %s117
      %p124 = scmp.eq.s32.totalorder %s23, 1
      %p125 = por %p123, %p124
      %p126 = scmp.ne.s32.totalorder %s117, %s118
      %p127 = scmp.eq.s32.totalorder %s23, 0
      %p128 = por %p126, %p127
      %p129 = scmp.ne.s32.totalorder %s117, %s118
      %p130 = scmp.eq.s32.totalorder %s24, 1
      %p131 = por %p129, %p130
      %p133 = scmp.ne.s32.totalorder %s118, %s132
      %p134 = scmp.eq.s32.totalorder %s24, 0
      %p135 = por %p133, %p134
      %s136 = ssub.s32 %s18, %s25
      %p137 = scmp.eq.s32.totalorder %s136, 0
      %s139 = sadd.s32 %s138, 1
      %s140 = scalar_select %p137, %s138, %s139
      %p143 = pneg %p137
      %p144 = scmp.eq.s32.totalorder %s18, 1
      %p145 = por %p143, %p144
      %p146 = scmp.ne.s32.totalorder %s138, %s141
      %p147 = scmp.eq.s32.totalorder %s18, 0
      %p148 = por %p146, %p147
      %p149 = scmp.ne.s32.totalorder %s138, %s141
      %p150 = scmp.eq.s32.totalorder %s23, 1
      %p151 = por %p149, %p150
      %p152 = scmp.ne.s32.totalorder %s141, %s142
      %p153 = scmp.eq.s32.totalorder %s23, 0
      %p154 = por %p152, %p153
      %p155 = scmp.ne.s32.totalorder %s141, %s142
      %p156 = scmp.eq.s32.totalorder %s24, 1
      %p157 = por %p155, %p156
      %p159 = scmp.ne.s32.totalorder %s142, %s158
      %p160 = scmp.eq.s32.totalorder %s24, 0
      %p161 = por %p159, %p160
      %p162 = scmp.le.s32.totalorder 1, %s18
      %p163 = scmp.lt.s32.totalorder %s18, 3
      %p164 = pnand %p162, %p163
      %p165 = pneg %p164
      // Predicated region
      $region9: #{tpu_custom_call.1} parent=5 // pred_check
        _
      $region10: #{tpu_custom_call.1} parent=5 // pred_check_branch
        %167 = sbr.rel (%p164) target = $region12
      $region11: #{tpu_custom_call.1} parent=5 // pred_region
        %s168 = ssub.s32 %s18, 1
        // Predicated region
        $region13: #{tpu_custom_call.1} parent=11 // pred_check
          %p169 = pneg %p65
        $region14: #{tpu_custom_call.1} parent=11 // pred_check_branch
          %171 = sbr.rel (%p169) target = $region16
        $region15: #{tpu_custom_call.1} parent=11 // pred_region
          %173 = vsyncadd [#allocation6], 0
          %s174 = sshll.u32 %s1, 4
          %s175 = int_to_ptr.hbm [resolvable:$true] %s174
          %s176 = sshll.u32 [#allocation5], 4
          %s177 = int_to_ptr.vmem [resolvable:$true] %s176
          %182 = dma.hbm_to_vmem [thread:$0]  %s175, 1024, %s177, [#allocation6], 64, 64, 4
        $region16: #{tpu_custom_call.1} parent=11 // pred_fallthru
          _
        // Predicated region
        $region17: #{tpu_custom_call.1} parent=11 // pred_check
          %p183 = pneg %p86
        $region18: #{tpu_custom_call.1} parent=11 // pred_check_branch
          %185 = sbr.rel (%p183) target = $region20
        $region19: #{tpu_custom_call.1} parent=11 // pred_region
          %187 = vsyncadd [#allocation6], 0
          %s188 = sshll.u32 %s2, 4
          %s189 = int_to_ptr.hbm [resolvable:$true] %s188
          %s190 = sshll.u32 [#allocation7], 4
          %s191 = int_to_ptr.vmem [resolvable:$true] %s190
          %196 = dma.hbm_to_vmem [thread:$0]  %s189, 384, %s191, [#allocation6], 128, 128, 8
        $region20: #{tpu_custom_call.1} parent=11 // pred_fallthru
          _
        // Predicated region
        $region21: #{tpu_custom_call.1} parent=11 // pred_check
          %p197 = pneg %p107
        $region22: #{tpu_custom_call.1} parent=11 // pred_check_branch
          %199 = sbr.rel (%p197) target = $region24
        $region23: #{tpu_custom_call.1} parent=11 // pred_region
          _
        $region24: #{tpu_custom_call.1} parent=11 // pred_fallthru
          _
        // Predicated region
        $region25: #{tpu_custom_call.1} parent=11 // pred_check
          %p200 = pneg %p128
        $region26: #{tpu_custom_call.1} parent=11 // pred_check_branch
          %202 = sbr.rel (%p200) target = $region28
        $region27: #{tpu_custom_call.1} parent=11 // pred_region
          _
        $region28: #{tpu_custom_call.1} parent=11 // pred_fallthru
          _
      $region12: #{tpu_custom_call.1} parent=5 // pred_fallthru
        _
      %p203 = scmp.lt.s32.totalorder %s18, 2
      // Predicated region
      $region29: #{tpu_custom_call.1} parent=5 // pred_check
        %p204 = pneg %p203
      $region30: #{tpu_custom_call.1} parent=5 // pred_check_branch
        %206 = sbr.rel (%p204) target = $region32
      $region31: #{tpu_custom_call.1} parent=5 // pred_region
        // Predicated region
        $region33: #{tpu_custom_call.1} parent=31 // pred_check
          %p207 = pneg %p38
        $region34: #{tpu_custom_call.1} parent=31 // pred_check_branch
          %209 = sbr.rel (%p207) target = $region36
        $region35: #{tpu_custom_call.1} parent=31 // pred_region
          %s210 = sand.u32 %s28, 1
          %s211 = scalar_lea.sflag [#allocation3], %s210
          %s212 = sand.u32 %s28, 1
          %s213 = smul.addr %s212, 12
          %s214 = scalar_lea.vmem [#allocation2], %s213
          %216 = vsyncadd %s211, 0
          %s217 = smul.addr %s18, 3
          %s218 = smul.addr %s217, 4
          %s219 = scalar_lea.hbm %s0, %s218
          %s220 = sshll.u32 %s219, 4
          %s221 = int_to_ptr.hbm [resolvable:$true] %s220
          %s222 = sshll.u32 %s214, 4
          %s223 = int_to_ptr.vmem [resolvable:$true] %s222
          %228 = dma.hbm_to_vmem [thread:$0]  %s221, 192, %s223, %s211, 64, 64, 4
        $region36: #{tpu_custom_call.1} parent=31 // pred_fallthru
          _
      $region32: #{tpu_custom_call.1} parent=5 // pred_fallthru
        _
      %p229 = scmp.le.s32.totalorder 1, %s18
      %p230 = scmp.lt.s32.totalorder %s18, 3
      %p231 = pnand %p229, %p230
      %p232 = pneg %p231
      // Predicated region
      $region37: #{tpu_custom_call.1} parent=5 // pred_check
        _
      $region38: #{tpu_custom_call.1} parent=5 // pred_check_branch
        %234 = sbr.rel (%p231) target = $region40
      $region39: #{tpu_custom_call.1} parent=5 // pred_region
        %s235 = ssub.s32 %s18, 1
        %s236 = sand.u32 %s31, 1
        %s237 = scalar_lea.sflag [#allocation3], %s236
        %s238 = sand.u32 %s31, 1
        %s239 = smul.addr %s238, 12
        %s240 = scalar_lea.vmem [#allocation2], %s239
        // Predicated region
        $region41: #{tpu_custom_call.1} parent=39 // pred_check
          %p241 = pneg %p44
        $region42: #{tpu_custom_call.1} parent=39 // pred_check_branch
          %243 = sbr.rel (%p241) target = $region44
        $region43: #{tpu_custom_call.1} parent=39 // pred_region
          %245 = dma.done %s237, 192
        $region44: #{tpu_custom_call.1} parent=39 // pred_fallthru
          _
        // Predicated region
        $region45: #{tpu_custom_call.1} parent=39 // pred_check
          %p246 = pneg %p65
        $region46: #{tpu_custom_call.1} parent=39 // pred_check_branch
          %248 = sbr.rel (%p246) target = $region48
        $region47: #{tpu_custom_call.1} parent=39 // pred_region
          %250 = dma.done [#allocation6], 1024
        $region48: #{tpu_custom_call.1} parent=39 // pred_fallthru
          _
        // Predicated region
        $region49: #{tpu_custom_call.1} parent=39 // pred_check
          %p251 = pneg %p86
        $region50: #{tpu_custom_call.1} parent=39 // pred_check_branch
          %253 = sbr.rel (%p251) target = $region52
        $region51: #{tpu_custom_call.1} parent=39 // pred_region
          %255 = dma.done [#allocation6], 384
        $region52: #{tpu_custom_call.1} parent=39 // pred_fallthru
          _
        %s256 = sand.u32 %s31, 1
        %s257 = scalar_lea.sflag [#allocation3], %s256
        %s258 = sand.u32 %s31, 1
        %s259 = smul.addr %s258, 12
        %s260 = scalar_lea.vmem [#allocation2], %s259
        %p261 = pneg %p44
        %p262 = pneg %p41
        %p263 = pneg %p65
        %p264 = pneg %p62
        %p265 = pneg %p86
        %p266 = pneg %p83
        %p267 = pneg %p107
        %p268 = pneg %p104
        %p269 = pneg %p128
        %p270 = pneg %p125
        %p271 = pneg %p154
        %p272 = pneg %p151
        %s273 = sand.u32 %s141, 1
        %s274 = scalar_lea.sflag [#allocation4], %s273
        %s275 = sand.u32 %s141, 1
        %s276 = smul.addr %s275, 24
        %s277 = scalar_lea.vmem [#allocation8], %s276
        %v278 = vld [vmem:[%s240] sm:$0xf]
        %v279 = vld [vmem:[%s240 + $0x4] sm:$0xf]
        %v280 = vld [vmem:[%s240 + $0x8] sm:$0xf]
        %v281 = vld [vmem:[#allocation5] sm:$0xf]
        %v282 = vld [vmem:[#allocation5 + $0x4] sm:$0xf]
        %v283 = vld [vmem:[#allocation5 + $0x8] sm:$0xf]
        %v284 = vld [vmem:[#allocation5 + $0xc] sm:$0xf]
        %v285 = vld [vmem:[#allocation5 + $0x10] sm:$0xf]
        %v286 = vld [vmem:[#allocation5 + $0x14] sm:$0xf]
        %v287 = vld [vmem:[#allocation5 + $0x18] sm:$0xf]
        %v288 = vld [vmem:[#allocation5 + $0x1c] sm:$0xf]
        %v289 = vld [vmem:[#allocation5 + $0x20] sm:$0xf]
        %v290 = vld [vmem:[#allocation5 + $0x24] sm:$0xf]
        %v291 = vld [vmem:[#allocation5 + $0x28] sm:$0xf]
        %v292 = vld [vmem:[#allocation5 + $0x2c] sm:$0xf]
        %v293 = vld [vmem:[#allocation5 + $0x30] sm:$0xf]
        %v294 = vld [vmem:[#allocation5 + $0x34] sm:$0xf]
        %v295 = vld [vmem:[#allocation5 + $0x38] sm:$0xf]
        %v296 = vld [vmem:[#allocation5 + $0x3c] sm:$0xf]
        %v300 = vunpack.c.l.b16 %v278
        %v301 = vunpack.c.l.b16 %v279
        %v302 = vunpack.c.l.b16 %v280
        %v303 = vpack.c.b16 %v301, %v300
        %v304 = vpack.c.b16 %v302, %v302
        %v323 = vunpack.c.l.b16 %v281
        %v324 = vunpack.c.l.b16 %v282
        %v325 = vunpack.c.l.b16 %v283
        %v326 = vunpack.c.l.b16 %v284
        %v327 = vunpack.c.l.b16 %v285
        %v328 = vunpack.c.l.b16 %v286
        %v329 = vunpack.c.l.b16 %v287
        %v330 = vunpack.c.l.b16 %v288
        %v331 = vunpack.c.l.b16 %v289
        %v332 = vunpack.c.l.b16 %v290
        %v333 = vunpack.c.l.b16 %v291
        %v334 = vunpack.c.l.b16 %v292
        %v335 = vunpack.c.l.b16 %v293
        %v336 = vunpack.c.l.b16 %v294
        %v337 = vunpack.c.l.b16 %v295
        %v338 = vunpack.c.l.b16 %v296
        %v339 = vpack.c.b16 %v324, %v323
        %v340 = vpack.c.b16 %v326, %v325
        %v341 = vpack.c.b16 %v328, %v327
        %v342 = vpack.c.b16 %v330, %v329
        %v343 = vpack.c.b16 %v332, %v331
        %v344 = vpack.c.b16 %v334, %v333
        %v345 = vpack.c.b16 %v336, %v335
        %v346 = vpack.c.b16 %v338, %v337
        %355 = vmatpush.bf16.msra.mxu0 %v346
        %356 = vmatpush.bf16.msra.mxu0 %v345
        %357 = vmatpush.bf16.msra.mxu0 %v344
        %358 = vmatpush.bf16.msra.mxu0 %v343
        %359 = vmatpush.bf16.msra.mxu0 %v342
        %360 = vmatpush.bf16.msra.mxu0 %v341
        %361 = vmatpush.bf16.msra.mxu0 %v340
        %362 = vmatpush.bf16.msra.mxu0 %v339
        %363 = vmatmul.bf16.gmra.mxu0 %v303
        %v364 = vpop.f32.mrf.mxu0
        %v365 = vadd.f32 0.0, %v364
        %v366 = vpop.f32.mrf.mxu0
        %v367 = vadd.f32 0.0, %v366
        %368 = vmatmul.bf16.gmra.mxu0 %v304
        %v369 = vpop.f32.mrf.mxu0
        %v370 = vadd.f32 0.0, %v369
        %v371 = vpop.f32.mrf.mxu0
        %372 = vdwg.mxu0
        %v373 = vld [vmem:[#allocation7] sm:$0xff]
        %v374 = vld [vmem:[#allocation7 + $0x8] sm:$0xff]
        %v375 = vld [vmem:[#allocation7 + $0x10] sm:$0xff]
        %v376 = vadd.f32 %v365, %v373
        %v377 = vadd.f32 %v367, %v374
        %v378 = vadd.f32 %v370, %v375
        %v379 = vld [vmem:[%s3] sm:$0x1]
        %v380 = vld [vmem:[%s4] sm:$0x1]
        %381 = vadd.xlane.f32.xlu0 %v376
        %v382 = vpop.xlane.xlu0 %381
        %383 = vadd.xlane.f32.xlu0 %v377
        %v384 = vpop.xlane.xlu0 %383
        %385 = vadd.xlane.f32.xlu0 %v378
        %v386 = vpop.xlane.xlu0 %385
        %v387 = vrcp.pop 128.0
        %v388 = vmul.f32 128.0, %v387
        %v389 = vsub.f32 1.0, %v388
        %v390 = vmul.f32 %v387, %v389
        %v391 = vadd.f32 %v387, %v390
        %vm392 = vweird.f32 %v387
        %v393 = vsel %vm392, %v387, %v391
        %v394 = vmul.f32 %v382, %v393
        %v395 = vmul.f32 %v384, %v393
        %v396 = vmul.f32 %v386, %v393
        %v397 = vsub.f32 %v376, %v394
        %v398 = vsub.f32 %v377, %v395
        %v399 = vsub.f32 %v378, %v396
        %v400 = vmul.f32 %v397, %v397
        %v401 = vmul.f32 %v398, %v398
        %v402 = vmul.f32 %v399, %v399
        %403 = vadd.xlane.f32.xlu0 %v400
        %v404 = vpop.xlane.xlu0 %403
        %405 = vadd.xlane.f32.xlu0 %v401
        %v406 = vpop.xlane.xlu0 %405
        %407 = vadd.xlane.f32.xlu0 %v402
        %v408 = vpop.xlane.xlu0 %407
        %v409 = vmul.f32 %v404, %v393
        %v410 = vmul.f32 %v406, %v393
        %v411 = vmul.f32 %v408, %v393
        %v412 = vadd.f32 %v409, 1e-05
        %v413 = vadd.f32 %v410, 1e-05
        %v414 = vadd.f32 %v411, 1e-05
        %v415 = vrsqrt.pop %v412
        %v416 = vmul.f32 %v415, %v412
        %v417 = vmul.f32 %v416, %v415
        %v418 = vmul.f32 0.5, %v417
        %v419 = vsub.f32 1.5, %v418
        %v420 = vmul.f32 %v415, %v419
        %vm421 = vweird.f32 %v412
        %vm422 = vweird.f32 %v415
        %vm423 = vmor %vm421, %vm422
        %v424 = vsel %vm423, %v415, %v420
        %v425 = vrsqrt.pop %v413
        %v426 = vmul.f32 %v425, %v413
        %v427 = vmul.f32 %v426, %v425
        %v428 = vmul.f32 0.5, %v427
        %v429 = vsub.f32 1.5, %v428
        %v430 = vmul.f32 %v425, %v429
        %vm431 = vweird.f32 %v413
        %vm432 = vweird.f32 %v425
        %vm433 = vmor %vm431, %vm432
        %v434 = vsel %vm433, %v425, %v430
        %v435 = vrsqrt.pop %v414
        %v436 = vmul.f32 %v435, %v414
        %v437 = vmul.f32 %v436, %v435
        %v438 = vmul.f32 0.5, %v437
        %v439 = vsub.f32 1.5, %v438
        %v440 = vmul.f32 %v435, %v439
        %vm441 = vweird.f32 %v414
        %vm442 = vweird.f32 %v435
        %vm443 = vmor %vm441, %vm442
        %v444 = vsel %vm443, %v435, %v440
        %v445 = vmul.f32 %v397, %v424
        %v446 = vmul.f32 %v398, %v434
        %v447 = vmul.f32 %v399, %v444
        %v449 = vperm.slane %v379, 0
        %v451 = vmul.f32 %v445, %v449
        %v452 = vmul.f32 %v446, %v449
        %v453 = vmul.f32 %v447, %v449
        %v455 = vperm.slane %v380, 0
        %v457 = vadd.f32 %v451, %v455
        %v458 = vadd.f32 %v452, %v455
        %v459 = vadd.f32 %v453, %v455
        %460 = vst [vmem:[%s277] sm:$0xff] %v457
        %461 = vst [vmem:[%s277 + $0x8] sm:$0xff] %v458
        %462 = vst [vmem:[%s277 + $0x10] sm:$0xff] %v459
        %s463 = sand.u32 %s141, 1
        %s464 = scalar_lea.sflag [#allocation4], %s463
        %s465 = sand.u32 %s141, 1
        %s466 = smul.addr %s465, 24
        %s467 = scalar_lea.vmem [#allocation8], %s466
        // Predicated region
        $region53: #{tpu_custom_call.1} parent=39 // pred_check
          %p468 = pneg %p151
        $region54: #{tpu_custom_call.1} parent=39 // pred_check_branch
          %470 = sbr.rel (%p468) target = $region56
        $region55: #{tpu_custom_call.1} parent=39 // pred_region
          %472 = vsyncadd %s464, 0
          %s473 = smul.addr %s23, 3
          %s474 = smul.addr %s473, 8
          %s475 = scalar_lea.hbm %s5, %s474
          %s476 = sshll.u32 %s467, 4
          %s477 = int_to_ptr.vmem [resolvable:$true] %s476
          %s478 = sshll.u32 %s475, 4
          %s479 = int_to_ptr.hbm [resolvable:$true] %s478
          %484 = dma.vmem_to_hbm [thread:$0]  %s477, 384, %s479, %s464, 128, 128, 8
        $region56: #{tpu_custom_call.1} parent=39 // pred_fallthru
          _
      $region40: #{tpu_custom_call.1} parent=5 // pred_fallthru
        _
      %p485 = scmp.le.s32.totalorder 2, %s18
      // Predicated region
      $region57: #{tpu_custom_call.1} parent=5 // pred_check
        %p486 = pneg %p485
      $region58: #{tpu_custom_call.1} parent=5 // pred_check_branch
        %488 = sbr.rel (%p486) target = $region60
      $region59: #{tpu_custom_call.1} parent=5 // pred_region
        %s489 = ssub.s32 %s18, 2
        // Predicated region
        $region61: #{tpu_custom_call.1} parent=59 // pred_check
          %p490 = pneg %p157
        $region62: #{tpu_custom_call.1} parent=59 // pred_check_branch
          %492 = sbr.rel (%p490) target = $region64
        $region63: #{tpu_custom_call.1} parent=59 // pred_region
          %s493 = sand.u32 %s142, 1
          %s494 = scalar_lea.sflag [#allocation4], %s493
          %s495 = sand.u32 %s142, 1
          %s496 = smul.addr %s495, 24
          %s497 = scalar_lea.vmem [#allocation8], %s496
          %499 = dma.done %s494, 384
        $region64: #{tpu_custom_call.1} parent=59 // pred_fallthru
          _
      $region60: #{tpu_custom_call.1} parent=5 // pred_fallthru
        _
    $region6: #{tpu_custom_call.1} parent=1 // loop_footer
      %s22 = sadd.s32 1, %s18
    $region7: #{tpu_custom_call.1} parent=1 // loop_footer_branch
      %17 = sbr.rel target = $region3
    $region8: #{tpu_custom_call.1} parent=1 // loop_exit
      _
    %500 = vsyncpa [#allocation3], 1
    %s501 = scalar_lea.sflag [#allocation3], 1
    %502 = vsyncpa %s501, 1
    %503 = vsyncpa [#allocation6], 1
    %504 = vsyncpa [#allocation4], 1
    %s505 = scalar_lea.sflag [#allocation4], 1
    %506 = vsyncpa %s505, 1

</llo_original>
